<compile_context>
chip_gen: v7x
topology: tpu7x:2x2x1
jax: 0.10.0
libtpu: 0.0.40
codegen_flags: <defaults>
</compile_context>

<pallas_src>
from typing import Any, Dict, List, Optional, Tuple

import jax
import jax.numpy as jnp
from jax.experimental import pallas as pl
from jax.experimental.pallas import tpu as pltpu


def _round_up(n: int, m: int) -> int:
    return ((n + m - 1) // m) * m


# ----------------------------------------------------------------------------
# Kernels
# ----------------------------------------------------------------------------
def _fused_pos_depth_kernel(sp_ref, dp_ref, w1_ref, w2_ref, o_ref):
    """Fused multi-head MLP, inputs = (x, y, depth).

    w1_ref: (4, H_total)  rows = [w_x, w_y, w_depth, bias]
    w2_ref: (H_total + 1, F_total)  last row = bias (block-diagonal weights above)
    """
    sp = sp_ref[...]                                   # (tm, 2) f32
    dp = dp_ref[...]                                   # (tm, 1) f32
    w1 = w1_ref[...]                                   # (4, Ht)
    # Layer 1 on the VPU as broadcast FMAs (no degenerate K=3 MXU matmul).
    h = (sp[:, 0:1] * w1[0:1, :] + sp[:, 1:2] * w1[1:2, :]
         + dp * w1[2:3, :] + w1[3:4, :])
    h = jnp.maximum(h, 0.0)                            # (tm, Ht)
    w2 = w2_ref[...]                                   # (Ht+1, Ft)
    y = jnp.dot(h, w2[:-1, :], preferred_element_type=jnp.float32) + w2[-1:, :]
    o_ref[...] = y.astype(o_ref.dtype)


def _fused_pos_kernel(sp_ref, w1_ref, w2_ref, o_ref):
    """Same as above but without a depth column. w1_ref: (3, H_total)."""
    sp = sp_ref[...]
    w1 = w1_ref[...]
    h = sp[:, 0:1] * w1[0:1, :] + sp[:, 1:2] * w1[1:2, :] + w1[2:3, :]
    h = jnp.maximum(h, 0.0)
    w2 = w2_ref[...]
    y = jnp.dot(h, w2[:-1, :], preferred_element_type=jnp.float32) + w2[-1:, :]
    o_ref[...] = y.astype(o_ref.dtype)


def _mlp_aug_kernel(x_ref, w1_ref, w2_ref, o_ref):
    """Generic fused 2-layer MLP with bias rows folded into the weights."""
    x = x_ref[...]
    w1 = w1_ref[...]
    h = jnp.dot(x, w1[:-1, :], preferred_element_type=jnp.float32) + w1[-1:, :]
    h = jnp.maximum(h, 0.0)
    w2 = w2_ref[...]
    y = jnp.dot(h, w2[:-1, :], preferred_element_type=jnp.float32) + w2[-1:, :]
    o_ref[...] = y.astype(o_ref.dtype)


# ----------------------------------------------------------------------------
# Wrappers
# ----------------------------------------------------------------------------
_TM_BASE = 512  # rows per grid step (feedback: 256-1024; single step for tiny B*N)


def _cost(rows, d_in, h, f, w1_size, w2_size):
    return pl.CostEstimate(
        flops=int(2 * rows * (d_in * h + h * f)),
        transcendentals=0,
        bytes_accessed=int(4 * (rows * (d_in + f) + w1_size + w2_size)),
    )


def fused_pos_mlp(sp, dp, w1aug, w2aug, *, tm_base: int = _TM_BASE):
    """Run the fused per-object MLP heads in one pallas_call.

    sp: (rows, 2); dp: (rows, 1) or None; w1aug: (d_in+1, Ht); w2aug: (Ht+1, Ft).
    Returns (rows, Ft) with the per-key outputs concatenated along the last dim.
    """
    rows = sp.shape[0]
    d_in = w1aug.shape[0] - 1
    ht = w1aug.shape[1]
    ft = w2aug.shape[1]
    tm = min(tm_base, _round_up(rows, 8))
    grid = (pl.cdiv(rows, tm),)

    has_depth = dp is not None
    kernel = _fused_pos_depth_kernel if has_depth else _fused_pos_kernel

    in_specs = [pl.BlockSpec((tm, 2), lambda i: (i, 0))]
    args = [sp]
    if has_depth:
        in_specs.append(pl.BlockSpec((tm, 1), lambda i: (i, 0)))
        args.append(dp)
    in_specs += [
        pl.BlockSpec(w1aug.shape, lambda i: (0, 0)),   # resident weights
        pl.BlockSpec(w2aug.shape, lambda i: (0, 0)),
    ]
    args += [w1aug, w2aug]

    return pl.pallas_call(
        kernel,
        out_shape=jax.ShapeDtypeStruct((rows, ft), sp.dtype),
        grid_spec=pltpu.PrefetchScalarGridSpec(
            num_scalar_prefetch=0,
            grid=grid,
            in_specs=in_specs,
            out_specs=pl.BlockSpec((tm, ft), lambda i: (i, 0)),
        ),
        compiler_params=pltpu.CompilerParams(dimension_semantics=("parallel",)),
        cost_estimate=_cost(rows, d_in, ht, ft, w1aug.size, w2aug.size),
    )(*args)


def mlp_pallas_aug(x, w1aug, w2aug, *, tm_base: int = _TM_BASE):
    """Generic row-tiled 2-layer MLP (used for global_processing keys)."""
    rows, d_in = x.shape
    ht = w1aug.shape[1]
    ft = w2aug.shape[1]
    tm = min(tm_base, _round_up(rows, 8))
    grid = (pl.cdiv(rows, tm),)
    return pl.pallas_call(
        _mlp_aug_kernel,
        out_shape=jax.ShapeDtypeStruct((rows, ft), x.dtype),
        grid_spec=pltpu.PrefetchScalarGridSpec(
            num_scalar_prefetch=0,
            grid=grid,
            in_specs=[
                pl.BlockSpec((tm, d_in), lambda i: (i, 0)),
                pl.BlockSpec(w1aug.shape, lambda i: (0, 0)),
                pl.BlockSpec(w2aug.shape, lambda i: (0, 0)),
            ],
            out_specs=pl.BlockSpec((tm, ft), lambda i: (i, 0)),
        ),
        compiler_params=pltpu.CompilerParams(dimension_semantics=("parallel",)),
        cost_estimate=_cost(rows, d_in, ht, ft, w1aug.size, w2aug.size),
    )(x, w1aug, w2aug)


# ----------------------------------------------------------------------------
# Deterministic parameter init for a `base_module` MLP
# ----------------------------------------------------------------------------
def init_mlp_params(key, d_in: int, d_hidden: int, d_out: int):
    k1, k2, k3, k4 = jax.random.split(key, 4)
    w1 = jax.random.normal(k1, (d_in, d_hidden), jnp.float32) / jnp.sqrt(d_in)
    b1 = 0.1 * jax.random.normal(k3, (1, d_hidden), jnp.float32)
    w2 = jax.random.normal(k2, (d_hidden, d_out), jnp.float32) / jnp.sqrt(d_hidden)
    b2 = 0.1 * jax.random.normal(k4, (1, d_out), jnp.float32)
    return {
        "w1": w1, "b1": b1, "w2": w2, "b2": b2,
        # Bias rows folded into augmented matrices (one input stream each).
        "w1aug": jnp.concatenate([w1, b1], axis=0),
        "w2aug": jnp.concatenate([w2, b2], axis=0),
    }


# ----------------------------------------------------------------------------
# StateInitializer (JAX/Pallas port)
# ----------------------------------------------------------------------------
class StateInitializerPallas:
    def __init__(
        self,
        state_init: Dict[str, Dict[str, Any]],
        prepend_background: bool,
        key,
        state_keys: Optional[List[str]] = None,
    ):
        self.state_init = state_init
        self.prepend_background = prepend_background
        self.state_keys = list(state_init.keys()) if state_keys is None else state_keys

        self.state_init_context: Dict[str, Dict[str, Any]] = {}
        keys = jax.random.split(key, max(1, len(state_init)))
        for i, (k, v) in enumerate(state_init.items()):
            if v["type"] in ("screen_pos", "screen_pos_with_depth", "boxes",
                             "screen_pos_with_z"):
                bm = v["base_module"]
                self.state_init_context[k] = {
                    "base": init_mlp_params(
                        keys[i], bm["in_features"], bm["hidden_features"],
                        bm["out_features"])
                }
            # TODO(synk): 'sample_norm_learned' / 'sample_uniform_learned' / 'learned'
            # parameters are never read in the reference forward pass; skipped.

        # ---- Build fused weights: one pallas_call for every per-object
        #      screen_pos / screen_pos_with_depth key (global_processing=False). ----
        self._fused = None
        fused_keys = [
            k for k, v in state_init.items()
            if v["type"] in ("screen_pos", "screen_pos_with_depth")
            and not v.get("global_processing", False)
        ]
        if fused_keys:
            has_depth = any(state_init[k]["type"] == "screen_pos_with_depth"
                            for k in fused_keys)
            d_shared = 3 if has_depth else 2
            w1_cols, b1_cols, b2_cols, w2_list = [], [], [], []
            f_slices: Dict[str, Tuple[int, int]] = {}
            h_total, f_total = 0, 0
            for k in fused_keys:
                p = self.state_init_context[k]["base"]
                w1, b1, w2, b2 = p["w1"], p["b1"], p["w2"], p["b2"]
                hk, fk = w2.shape
                if w1.shape[0] < d_shared:  # screen_pos key: zero weight on depth col
                    pad = jnp.zeros((d_shared - w1.shape[0], hk), w1.dtype)
                    w1 = jnp.concatenate([w1, pad], axis=0)
                w1_cols.append(w1)
                b1_cols.append(b1.reshape(1, hk))
                w2_list.append(w2)
                b2_cols.append(b2.reshape(1, fk))
                f_slices[k] = (f_total, fk)
                h_total += hk
                f_total += fk
            w1f = jnp.concatenate(w1_cols, axis=1)                    # (d, Ht)
            b1f = jnp.concatenate(b1_cols, axis=1)                    # (1, Ht)
            w1aug = jnp.concatenate([w1f, b1f], axis=0)               # (d+1, Ht)
            w2f = jnp.zeros((h_total, f_total), jnp.float32)          # block-diagonal
            h_off = 0
            for k, w2k in zip(fused_keys, w2_list):
                fo, fk = f_slices[k]
                w2f = w2f.at[h_off:h_off + w2k.shape[0], fo:fo + fk].set(w2k)
                h_off += w2k.shape[0]
            b2f = jnp.concatenate(b2_cols, axis=1)                    # (1, Ft)
            w2aug = jnp.concatenate([w2f, b2f], axis=0)               # (Ht+1, Ft)
            self._fused = {"keys": fused_keys, "has_depth": has_depth,
                           "w1aug": w1aug, "w2aug": w2aug, "f_slices": f_slices}

    def __call__(
        self, batch: Optional[Dict[str, Any]], batch_size: int
    ) -> Tuple[Dict[str, jnp.ndarray], Optional[Dict[str, jnp.ndarray]]]:
        res: Dict[str, jnp.ndarray] = {}

        fused_out = None
        B = N = None
        if self._fused is not None:
            assert batch is not None
            sp = batch["screen_positions"][:, 0]                      # (B, N, 2)
            B, N = sp.shape[0], sp.shape[1]
            sp2 = sp.reshape(B * N, 2)
            dp2 = None
            if self._fused["has_depth"]:
                dp2 = batch["screen_coord_depth"][:, 0].reshape(B * N, 1)
            fused_out = fused_pos_mlp(sp2, dp2,
                                      self._fused["w1aug"], self._fused["w2aug"])

        for k, v in self.state_init.items():
            t = v["type"]
            if t == "gt":
                assert batch is not None
                res[k] = batch[k][:, 0]
            elif t in ("screen_pos", "screen_pos_with_depth"):
                assert batch is not None
                if not v.get("global_processing", False):
                    fo, fk = self._fused["f_slices"][k]
                    res[k] = fused_out[:, fo:fo + fk].reshape(B, N, fk)
                else:
                    sp = batch["screen_positions"][:, 0]
                    if t == "screen_pos_with_depth":
                        dp = batch["screen_coord_depth"][:, 0]
                        pos = jnp.concatenate([sp, dp], axis=-1)
                    else:
                        pos = sp
                    nobj = pos.shape[1]
                    x = pos.reshape(pos.shape[0], -1)
                    p = self.state_init_context[k]["base"]
                    out = mlp_pallas_aug(x, p["w1aug"], p["w2aug"])
                    res[k] = out.reshape(out.shape[0], nobj, -1)

        if self.prepend_background:
            # TODO(synk): could be folded into the kernel by emitting a (B, N+1, F)
            # output block and writing the zero background row with a second store.
            for k in list(res.keys()):
                bg = jnp.zeros_like(res[k][:, :1])
                res[k] = jnp.concatenate([bg, res[k]], axis=1)
        return res, None


# ----------------------------------------------------------------------------
# Pure-JAX reference for correctness checking
# ----------------------------------------------------------------------------
def _mlp_ref(x, p):
    h = jnp.maximum(jnp.dot(x, p["w1"], precision="highest") + p["b1"], 0.0)
    return jnp.dot(h, p["w2"], precision="highest") + p["b2"]


if __name__ == "__main__":
    key = jax.random.PRNGKey(0)
    k_params, k_pos, k_depth = jax.random.split(key, 3)

    B, T, N = 2, 3, 8          # batch, time, num objects
    HIDDEN, OUT = 32, 64       # two 64-wide heads -> fused output is 128 lanes

    state_init = {
        "pos_state": {
            "type": "screen_pos",
            "base_module": {"in_features": 2, "hidden_features": HIDDEN,
                            "out_features": OUT},
            "global_processing": False,
        },
        "pos_depth_state": {
            "type": "screen_pos_with_depth",
            "base_module": {"in_features": 3, "hidden_features": HIDDEN,
                            "out_features": OUT},
            "global_processing": False,
        },
    }

    batch = {
        "screen_positions": jax.random.uniform(k_pos, (B, T, N, 2), jnp.float32),
        "screen_coord_depth": jax.random.uniform(k_depth, (B, T, N, 1), jnp.float32),
    }

    model = StateInitializerPallas(state_init, prepend_background=True, key=k_params)
    res, _ = model(batch, batch_size=B)
    jax.block_until_ready(res)

    # Reference check (including the background prepend).
    sp = batch["screen_positions"][:, 0]
    dp = batch["screen_coord_depth"][:, 0]
    ref_pos = _mlp_ref(sp.reshape(B * N, 2),
                       model.state_init_context["pos_state"]["base"]).reshape(B, N, OUT)
    ref_pos = jnp.concatenate([jnp.zeros_like(ref_pos[:, :1]), ref_pos], axis=1)
    pd = jnp.concatenate([sp, dp], axis=-1)
    ref_pd = _mlp_ref(pd.reshape(B * N, 3),
                      model.state_init_context["pos_depth_state"]["base"]).reshape(B, N, OUT)
    ref_pd = jnp.concatenate([jnp.zeros_like(ref_pd[:, :1]), ref_pd], axis=1)

    assert res["pos_state"].shape == (B, N + 1, OUT)
    assert res["pos_depth_state"].shape == (B, N + 1, OUT)
    assert jnp.allclose(res["pos_state"], ref_pos, atol=1e-4, rtol=1e-4)
    assert jnp.allclose(res["pos_depth_state"], ref_pd, atol=1e-4, rtol=1e-4)

    print("KERNEL_OK")
</pallas_src>

<mosaic_0001>
module attributes {stable_mosaic.version = 11 : i64} {
  func.func @_fused_pos_depth_kernel(%arg0: i32, %arg1: memref<16x2xf32, #tpu.memory_space<vmem>>, %arg2: memref<16x1xf32, #tpu.memory_space<vmem>>, %arg3: memref<4x64xf32, #tpu.memory_space<vmem>>, %arg4: memref<65x128xf32, #tpu.memory_space<vmem>>, %arg5: memref<16x128xf32, #tpu.memory_space<vmem>>) attributes {dimension_semantics = [#tpu.dimension_semantics<parallel>], iteration_bounds = array<i64: 1>, scalar_prefetch = 0 : i64, scratch_operands = 0 : i64, tpu.core_type = #tpu.core_type<tc>, window_params = [{transform_indices = @transform_0, window_bounds = array<i64: 16, 2>}, {transform_indices = @transform_1, window_bounds = array<i64: 16, 1>}, {pipeline_mode = #tpu.pipeline_mode<synchronous>, transform_indices = @transform_2, window_bounds = array<i64: 4, 64>}, {pipeline_mode = #tpu.pipeline_mode<synchronous>, transform_indices = @transform_3, window_bounds = array<i64: 65, 128>}, {transform_indices = @transform_4, window_bounds = array<i64: 16, 128>}]} {
    %c0 = arith.constant 0 : index
    %c0_0 = arith.constant 0 : index
    %0 = vector.load %arg1[%c0, %c0_0] : memref<16x2xf32, #tpu.memory_space<vmem>>, vector<16x2xf32>
    %c0_1 = arith.constant 0 : index
    %c0_2 = arith.constant 0 : index
    %1 = vector.load %arg2[%c0_1, %c0_2] : memref<16x1xf32, #tpu.memory_space<vmem>>, vector<16x1xf32>
    %c0_3 = arith.constant 0 : index
    %c0_4 = arith.constant 0 : index
    %2 = vector.load %arg3[%c0_3, %c0_4] : memref<4x64xf32, #tpu.memory_space<vmem>>, vector<4x64xf32>
    %3 = vector.extract_strided_slice %0 {offsets = [0, 0], sizes = [16, 1], strides = [1, 1]} : vector<16x2xf32> to vector<16x1xf32>
    %4 = vector.extract_strided_slice %2 {offsets = [0, 0], sizes = [1, 64], strides = [1, 1]} : vector<4x64xf32> to vector<1x64xf32>
    %5 = vector.broadcast %3 : vector<16x1xf32> to vector<16x64xf32>
    %6 = vector.broadcast %4 : vector<1x64xf32> to vector<16x64xf32>
    %7 = arith.mulf %5, %6 : vector<16x64xf32>
    %8 = vector.extract_strided_slice %0 {offsets = [0, 1], sizes = [16, 1], strides = [1, 1]} : vector<16x2xf32> to vector<16x1xf32>
    %9 = vector.extract_strided_slice %2 {offsets = [1, 0], sizes = [1, 64], strides = [1, 1]} : vector<4x64xf32> to vector<1x64xf32>
    %10 = vector.broadcast %8 : vector<16x1xf32> to vector<16x64xf32>
    %11 = vector.broadcast %9 : vector<1x64xf32> to vector<16x64xf32>
    %12 = arith.mulf %10, %11 : vector<16x64xf32>
    %13 = arith.addf %7, %12 : vector<16x64xf32>
    %14 = vector.extract_strided_slice %2 {offsets = [2, 0], sizes = [1, 64], strides = [1, 1]} : vector<4x64xf32> to vector<1x64xf32>
    %15 = vector.broadcast %1 : vector<16x1xf32> to vector<16x64xf32>
    %16 = vector.broadcast %14 : vector<1x64xf32> to vector<16x64xf32>
    %17 = arith.mulf %15, %16 : vector<16x64xf32>
    %18 = arith.addf %13, %17 : vector<16x64xf32>
    %19 = vector.extract_strided_slice %2 {offsets = [3, 0], sizes = [1, 64], strides = [1, 1]} : vector<4x64xf32> to vector<1x64xf32>
    %20 = vector.broadcast %19 : vector<1x64xf32> to vector<16x64xf32>
    %21 = arith.addf %18, %20 : vector<16x64xf32>
    %cst = arith.constant 0.000000e+00 : f32
    %22 = vector.broadcast %cst : f32 to vector<16x64xf32>
    %23 = arith.maximumf %21, %22 : vector<16x64xf32>
    %c0_5 = arith.constant 0 : index
    %c0_6 = arith.constant 0 : index
    %24 = vector.load %arg4[%c0_5, %c0_6] : memref<65x128xf32, #tpu.memory_space<vmem>>, vector<65x128xf32>
    %25 = vector.extract_strided_slice %24 {offsets = [0, 0], sizes = [64, 128], strides = [1, 1]} : vector<65x128xf32> to vector<64x128xf32>
    %cst_7 = arith.constant dense<0.000000e+00> : vector<16x128xf32>
    %26 = tpu.matmul %23, %25, %cst_7 {dimension_numbers = #tpu.dot_dimension_numbers<[1], [0], [0], [1], [0, 0, 1, 1], [], []>} : vector<16x64xf32>, vector<64x128xf32>, vector<16x128xf32> -> vector<16x128xf32>
    %27 = vector.extract_strided_slice %24 {offsets = [64, 0], sizes = [1, 128], strides = [1, 1]} : vector<65x128xf32> to vector<1x128xf32>
    %28 = vector.broadcast %27 : vector<1x128xf32> to vector<16x128xf32>
    %29 = arith.addf %26, %28 : vector<16x128xf32>
    %c0_8 = arith.constant 0 : index
    %c0_9 = arith.constant 0 : index
    %30 = vector.load %arg5[%c0_8, %c0_9] : memref<16x128xf32, #tpu.memory_space<vmem>>, vector<16x128xf32>
    tpu.vector_store %arg5[%c0_8, %c0_9], %29 {strides = array<i32>} : memref<16x128xf32, #tpu.memory_space<vmem>>, vector<16x128xf32>,
    return
  }
  func.func @transform_0(%arg0: i32) -> (i32, i32) {
    %c0_i32 = arith.constant 0 : i32
    %c0_i32_0 = arith.constant 0 : i32
    return %arg0, %c0_i32 : i32, i32
  }
  func.func @transform_1(%arg0: i32) -> (i32, i32) {
    %c0_i32 = arith.constant 0 : i32
    %c0_i32_0 = arith.constant 0 : i32
    return %arg0, %c0_i32 : i32, i32
  }
  func.func @transform_2(%arg0: i32) -> (i32, i32) {
    %c0_i32 = arith.constant 0 : i32
    %c0_i32_0 = arith.constant 0 : i32
    %c0_i32_1 = arith.constant 0 : i32
    return %c0_i32, %c0_i32_0 : i32, i32
  }
  func.func @transform_3(%arg0: i32) -> (i32, i32) {
    %c0_i32 = arith.constant 0 : i32
    %c0_i32_0 = arith.constant 0 : i32
    %c0_i32_1 = arith.constant 0 : i32
    return %c0_i32, %c0_i32_0 : i32, i32
  }
  func.func @transform_4(%arg0: i32) -> (i32, i32) {
    %c0_i32 = arith.constant 0 : i32
    %c0_i32_0 = arith.constant 0 : i32
    return %arg0, %c0_i32 : i32, i32
  }
}

</mosaic_0001>

<llo_original>
// kernel: tpu_custom_call.1
$region0: #{tpu_custom_call.1}
  #allocation0 [shape = 'u32[]', space=smem, size = 0x4, offset = 0x4, fixed_abs, tag = 'smem constant byte address 0x4 - core index']
  #allocation1 [shape = 'u32[144,128]{1,0:T(1,128)}', space=vmem, size = 0x12000, scoped, tag = 'internal scratch']
  %s0 = inlined_call_operand.vmem [shape: f32[16,2], index: 0, kind: input, shape index: {}]
  %s1 = inlined_call_operand.vmem [shape: f32[16,1], index: 1, kind: input, shape index: {}]
  %s2 = inlined_call_operand.vmem [shape: f32[4,64], index: 2, kind: input, shape index: {}]
  %s3 = inlined_call_operand.hbm [shape: f32[65,128], index: 3, kind: input, shape index: {}]
  %s4 = inlined_call_operand.hbm [shape: f32[16,128], index: 4, kind: output, shape index: {}]
  %s5 = sld [smem:[#allocation0]]
  $region30: #{tpu_custom_call.1} parent=0
    _
  %s7 = ssub.s32 1, %s5
  %s8 = scalar_select 0, %s7, %s5
  $region1: #{tpu_custom_call.1} parent=0
    #allocation2 [shape = 'u8[36864]{0}', space=vmem, size = 0x9000, scoped, tag = 'input window, operand 3, single buffered']
    #allocation3 [shape = 's32[1]{0}', space=sflag, size = 0x4, scoped, tag = 'scoped memory for tpu_custom_call.1']
    #allocation4 [shape = 's32[1]{0}', space=sflag, size = 0x4, scoped, tag = 'scoped memory for tpu_custom_call.1']
    #allocation5 [shape = 'u8[8192]{0}', space=vmem, size = 0x2000, scoped, tag = 'output window, operand 0, single buffered']
    %9 = vsyncpa [#allocation3], 0
    %10 = vsyncpa [#allocation4], 0
    // Predicated region
    $region2: #{tpu_custom_call.1} parent=1 // pred_check
      _
    $region3: #{tpu_custom_call.1} parent=1 // pred_check_branch
      %12 = sbr.rel (0) target = $region5
    $region4: #{tpu_custom_call.1} parent=1 // pred_region
      _
    $region5: #{tpu_custom_call.1} parent=1 // pred_fallthru
      _
    // Predicated region
    $region6: #{tpu_custom_call.1} parent=1 // pred_check
      _
    $region7: #{tpu_custom_call.1} parent=1 // pred_check_branch
      %14 = sbr.rel (0) target = $region9
    $region8: #{tpu_custom_call.1} parent=1 // pred_region
      _
    $region9: #{tpu_custom_call.1} parent=1 // pred_fallthru
      _
    // Predicated region
    $region10: #{tpu_custom_call.1} parent=1 // pred_check
      _
    $region11: #{tpu_custom_call.1} parent=1 // pred_check_branch
      %16 = sbr.rel (0) target = $region13
    $region12: #{tpu_custom_call.1} parent=1 // pred_region
      _
    $region13: #{tpu_custom_call.1} parent=1 // pred_fallthru
      _
    // Predicated region
    $region14: #{tpu_custom_call.1} parent=1 // pred_check
      _
    $region15: #{tpu_custom_call.1} parent=1 // pred_check_branch
      %18 = sbr.rel (0) target = $region17
    $region16: #{tpu_custom_call.1} parent=1 // pred_region
      %s20 = ssub.s32 1152, 1152
      %21 = vsyncadd [#allocation3], %s20
      %s22 = sshll.u32 [#allocation2], 4
      %s23 = int_to_ptr.vmem [resolvable:$true] %s22
      %28 = dma.hbm_to_vmem [thread:$0]  %s3, 1152, %s23, [#allocation3], 128, 128, 8
    $region17: #{tpu_custom_call.1} parent=1 // pred_fallthru
      _
    // Predicated region
    $region18: #{tpu_custom_call.1} parent=1 // pred_check
      _
    $region19: #{tpu_custom_call.1} parent=1 // pred_check_branch
      %30 = sbr.rel (0) target = $region21
    $region20: #{tpu_custom_call.1} parent=1 // pred_region
      %31 = dma.done [#allocation3], 1152
    $region21: #{tpu_custom_call.1} parent=1 // pred_fallthru
      _
    %v32 = vld [vmem:[%s0] sm:$0xff]
    %v33 = vld [vmem:[%s0 + $0x8] sm:$0xff]
    %v34 = vld [vmem:[%s1] sm:$0xff]
    %v35 = vld [vmem:[%s1 + $0x8] sm:$0xff]
    %v36 = vld [vmem:[%s2] sm:$0xf]
    %38 = vset.pattern.permute.xlu0 0
    %39 = vperm.xlu0 %38, %v32
    %v40 = vpop.permute.xlu0 %39
    %43 = vset.pattern.permute.xlu0 0
    %44 = vperm.xlu0 %43, %v33
    %v45 = vpop.permute.xlu0 %44
    %v47 = vlaneseq
    %v48 = vshrl.u32 %v47, 7
    %v49 = vsub.s32 0, %v48
    %v50 = vrot.slane %v36, %v49
    %v51 = vmul.f32 %v40, %v50
    %v52 = vmul.f32 %v45, %v50
    %53 = vset.pattern.permute.xlu0 1
    %54 = vperm.xlu0 %53, %v32
    %v55 = vpop.permute.xlu0 %54
    %57 = vset.pattern.permute.xlu0 1
    %58 = vperm.xlu0 %57, %v33
    %v59 = vpop.permute.xlu0 %58
    %v61 = vlaneseq
    %v62 = vshrl.u32 %v61, 7
    %v63 = vsub.s32 1, %v62
    %v64 = vrot.slane %v36, %v63
    %v65 = vmul.f32 %v55, %v64
    %v66 = vmul.f32 %v59, %v64
    %v67 = vadd.f32 %v51, %v65
    %v68 = vadd.f32 %v52, %v66
    %70 = vset.pattern.permute.xlu0 0
    %71 = vperm.xlu0 %70, %v34
    %v72 = vpop.permute.xlu0 %71
    %75 = vset.pattern.permute.xlu0 0
    %76 = vperm.xlu0 %75, %v35
    %v77 = vpop.permute.xlu0 %76
    %v79 = vlaneseq
    %v80 = vshrl.u32 %v79, 7
    %v81 = vsub.s32 2, %v80
    %v82 = vrot.slane %v36, %v81
    %v83 = vmul.f32 %v72, %v82
    %v84 = vmul.f32 %v77, %v82
    %v85 = vadd.f32 %v67, %v83
    %v86 = vadd.f32 %v68, %v84
    %v87 = vlaneseq
    %v88 = vshrl.u32 %v87, 7
    %v89 = vsub.s32 3, %v88
    %v90 = vrot.slane %v36, %v89
    %v91 = vadd.f32 %v85, %v90
    %v92 = vadd.f32 %v86, %v90
    %v93 = vmax.f32 %v91, 0.0
    %v94 = vmax.f32 %v92, 0.0
    %v95 = vld [vmem:[#allocation2] sm:$0xff]
    %v96 = vld [vmem:[#allocation2 + $0x8] sm:$0xff]
    %v97 = vld [vmem:[#allocation2 + $0x10] sm:$0xff]
    %v98 = vld [vmem:[#allocation2 + $0x18] sm:$0xff]
    %v99 = vld [vmem:[#allocation2 + $0x20] sm:$0xff]
    %v100 = vld [vmem:[#allocation2 + $0x28] sm:$0xff]
    %v101 = vld [vmem:[#allocation2 + $0x30] sm:$0xff]
    %v102 = vld [vmem:[#allocation2 + $0x38] sm:$0xff]
    %v103 = vld [vmem:[#allocation2 + $0x40] sm:$0x1]
    %v104 = vlaneseq
    %v105 = vshrl.u32 %v104, 7
    %v106 = vsub.s32 0, %v105
    %v107 = vrot.slane %v103, %v106
    %vm108 = vcmask 523264
    %v110 = vsel %vm108, %v93, 0
    %v113 = vsel %vm108, %v94, 0
    %115 = vmatprep.subr.mxu0 0.0
    %116 = vmatpush1.msra.mxu0 %v95
    %117 = vmatprep.subr.mxu0 0.0
    %118 = vmatpush1.msra.mxu0 %v96
    %119 = vmatprep.subr.mxu0 0.0
    %120 = vmatpush1.msra.mxu0 %v97
    %121 = vmatprep.subr.mxu0 0.0
    %122 = vmatpush1.msra.mxu0 %v98
    %123 = vmatprep.subr.mxu0 0.0
    %124 = vmatpush1.msra.mxu0 %v99
    %125 = vmatprep.subr.mxu0 0.0
    %126 = vmatpush1.msra.mxu0 %v100
    %127 = vmatprep.subr.mxu0 0.0
    %128 = vmatpush1.msra.mxu0 %v101
    %129 = vmatprep.subr.mxu0 0.0
    %130 = vmatpush1.msra.mxu0 %v102
    %131 = vmatprep.subr.mxu0 0.0
    %132 = vmatpush1.msra.mxu0 0.0
    %133 = vmatprep.subr.mxu0 0.0
    %134 = vmatpush1.msra.mxu0 0.0
    %135 = vmatprep.subr.mxu0 0.0
    %136 = vmatpush1.msra.mxu0 0.0
    %137 = vmatprep.subr.mxu0 0.0
    %138 = vmatpush1.msra.mxu0 0.0
    %139 = vmatprep.subr.mxu0 0.0
    %140 = vmatpush1.msra.mxu0 0.0
    %141 = vmatprep.subr.mxu0 0.0
    %142 = vmatpush1.msra.mxu0 0.0
    %143 = vmatprep.subr.mxu0 0.0
    %144 = vmatpush1.msra.mxu0 0.0
    %145 = vmatprep.subr.mxu0 0.0
    %146 = vmatpush1.msra.mxu0 0.0
    %147 = vmatprep.subr.mxu0 0.0
    %148 = vmatpush1.msra.mxu0 0.0
    %149 = vmatprep.subr.mxu0 0.0
    %150 = vmatpush1.msra.mxu0 0.0
    %151 = vmatprep.subr.mxu0 0.0
    %152 = vmatpush1.msra.mxu0 0.0
    %153 = vmatprep.subr.mxu0 0.0
    %154 = vmatpush1.msra.mxu0 0.0
    %155 = vmatprep.subr.mxu0 0.0
    %156 = vmatpush1.msra.mxu0 0.0
    %157 = vmatprep.subr.mxu0 0.0
    %158 = vmatpush1.msra.mxu0 0.0
    %159 = vmatprep.subr.mxu0 0.0
    %160 = vmatpush1.msra.mxu0 0.0
    %161 = vmatprep.subr.mxu0 0.0
    %162 = vmatpush1.msra.mxu0 0.0
    %163 = vmatprep.subr.mxu0 0.0
    %164 = vmatpush1.msra.mxu0 0.0
    %165 = vmatprep.subr.mxu0 0.0
    %166 = vmatpush1.msra.mxu0 0.0
    %167 = vmatprep.subr.mxu0 0.0
    %168 = vmatpush1.msra.mxu0 0.0
    %169 = vmatprep.subr.mxu0 0.0
    %170 = vmatpush1.msra.mxu0 0.0
    %171 = vmatprep.subr.mxu0 0.0
    %172 = vmatpush1.msra.mxu0 0.0
    %173 = vmatprep.subr.mxu0 0.0
    %174 = vmatpush1.msra.mxu0 0.0
    %175 = vmatprep.subr.mxu0 0.0
    %176 = vmatpush1.msra.mxu0 0.0
    %177 = vmatprep.subr.mxu0 0.0
    %178 = vmatpush1.msra.mxu0 0.0
    %179 = vmatprep.mubr.f32.mxu0 0.0
    %180 = vmatmul.mubr.f32.gmra.mrb[0].mxu0 %v110
    %v181 = vpop.f32.mrb[0].mxu0
    %v182 = vadd.f32 %v107, %v181
    %v183 = vpop.f32.mrb[0].mxu0
    %184 = vmatprep.mubr.f32.mxu0 0.0
    %185 = vmatmul.mubr.f32.gmra.mrb[0].mxu0 %v113
    %v186 = vpop.f32.mrb[0].mxu0
    %v187 = vadd.f32 %v107, %v186
    %v188 = vpop.f32.mrb[0].mxu0
    %189 = vdwg.mxu0
    %190 = vst [vmem:[#allocation5] sm:$0xff] %v182
    %191 = vst [vmem:[#allocation5 + $0x8] sm:$0xff] %v187
    // Predicated region
    $region22: #{tpu_custom_call.1} parent=1 // pred_check
      _
    $region23: #{tpu_custom_call.1} parent=1 // pred_check_branch
      %193 = sbr.rel (0) target = $region25
    $region24: #{tpu_custom_call.1} parent=1 // pred_region
      %s195 = ssub.s32 256, 256
      %196 = vsyncadd [#allocation4], %s195
      %s197 = sshll.u32 [#allocation5], 4
      %s198 = int_to_ptr.vmem [resolvable:$true] %s197
      %203 = dma.vmem_to_hbm [thread:$0]  %s198, 256, %s4, [#allocation4], 128, 128, 8
    $region25: #{tpu_custom_call.1} parent=1 // pred_fallthru
      _
    // Predicated region
    $region26: #{tpu_custom_call.1} parent=1 // pred_check
      _
    $region27: #{tpu_custom_call.1} parent=1 // pred_check_branch
      %205 = sbr.rel (0) target = $region29
    $region28: #{tpu_custom_call.1} parent=1 // pred_region
      %206 = dma.done [#allocation4], 256
    $region29: #{tpu_custom_call.1} parent=1 // pred_fallthru
      _
    %207 = vsyncpa [#allocation3], 1
    %208 = vsyncpa [#allocation4], 1

</llo_original>
